<compile_context>
chip_gen: v7x
topology: tpu7x:2x2x1
jax: 0.10.0
libtpu: 0.0.40
codegen_flags: <defaults>
</compile_context>

<pallas_src>
import functools

import jax
import jax.numpy as jnp
from jax import lax
from jax.experimental import pallas as pl
from jax.experimental.pallas import tpu as pltpu


def _round_up(a, b):
    return ((a + b - 1) // b) * b


def _vmem_limit_bytes():
    # Generation-aware scoped-VMEM limit: ~40 MiB on v7x (64 MiB physical),
    # ~80 MiB on v5e/v6e (128 MiB physical), never below 32 MiB.
    try:
        cap = int(pltpu.get_tpu_info().vmem_capacity_bytes)
    except Exception:  # pragma: no cover - conservative fallback
        cap = 64 * 1024 * 1024
    return max(min(cap * 5 // 8, 96 * 1024 * 1024), 32 * 1024 * 1024)


@functools.partial(jax.jit,
                   static_argnames=("stride", "padding", "dilation", "eps"))
def conv_bn_relu(x_nchw, w_oihw, gamma, beta, *, stride=1, padding=0,
                 dilation=1, eps=1e-5):
    x = x_nchw.astype(jnp.float32)
    w = w_oihw.astype(jnp.float32)
    N, Cin, H, W = x.shape
    Cout, _, KH, KW = w.shape

    if stride != 1:
        # TODO(synk): strided fast path (the flat-window trick needs stride==1).
        raise NotImplementedError("conv_bn_relu fast path requires stride == 1")

    Hp, Wp = H + 2 * padding, W + 2 * padding
    OH = Hp - dilation * (KH - 1)
    OW = Wp - dilation * (KW - 1)
    K = KH * KW * Cin
    M = N * OH * OW                     # number of valid output positions
    LANE = 128
    Lpad = _round_up(Hp * Wp, LANE)     # per-image lane-dense "wide" width
    OHWp = OH * Wp                      # wide columns holding real output rows
    TOTW = N * Lpad

    # ---- layout glue (pure XLA): NCHW is already channels-major; just pad the
    # spatial dims and flatten them into one lane-dense axis per (image, chan).
    x_p = jnp.pad(x, ((0, 0), (0, 0), (padding, padding), (padding, padding)))
    x_flat = jnp.pad(x_p.reshape(N, Cin, Hp * Wp),
                     ((0, 0), (0, 0), (0, Lpad - Hp * Wp)))

    # Weights as (Cout, K), K ordered (kh, kw, cin) to match the patch rows.
    w_mat = jnp.transpose(w, (0, 2, 3, 1)).reshape(Cout, K)
    g_col = gamma.astype(jnp.float32).reshape(Cout, 1)
    b_col = beta.astype(jnp.float32).reshape(Cout, 1)

    # Valid-output-column mask over one image's wide row (precomputed in XLA so
    # the kernel needs no integer div/mod): column p = oh*Wp + j is valid iff
    # j < OW and p < OH*Wp.
    cols = jnp.arange(Lpad, dtype=jnp.int32)
    mask_row = (((cols % Wp) < OW) & (cols < OHWp)).astype(jnp.float32)
    mask_row = mask_row.reshape(1, Lpad)

    # ---- generation-aware VMEM budget & image-tile (B_tile) selection ----
    vmem_limit = _vmem_limit_bytes()
    cin_p = _round_up(Cin, 8)
    cout_p = _round_up(Cout, 8)
    k_p = _round_up(K, 8)
    resident_b = cout_p * TOTW * 4                                   # output slab
    weights_b = 2 * (cout_p * _round_up(K, LANE) + 3 * 8 * LANE) * 4  # W, g, b, mask
    temps_b = (k_p + KH * KW * cin_p + 2 * cout_p) * Lpad * 4         # P + taps + y

    def _usage(bt):
        return resident_b + weights_b + temps_b + 2 * bt * cin_p * Lpad * 4

    B_tile = 1
    for bt in range(min(N, 8), 0, -1):
        if N % bt == 0 and 3 * _usage(bt) // 2 < vmem_limit:
            B_tile = bt
            break
    # TODO(synk): two-phase streaming fallback (conv+stats pass, then in-place
    # BN+ReLU via input_output_aliases) for activations above this budget.
    assert 3 * _usage(1) // 2 < vmem_limit, (
        "activation too large for the fused resident-output kernel")
    steps = N // B_tile

    def kernel(x_ref, w_ref, g_ref, b_ref, m_ref, o_ref, sum_ref, sq_ref):
        step = pl.program_id(0)

        @pl.when(step == 0)
        def _init():
            sum_ref[...] = jnp.zeros_like(sum_ref)
            sq_ref[...] = jnp.zeros_like(sq_ref)

        w_cm = w_ref[...]                              # (Cout, K)
        mask = m_ref[...]                              # (1, Lpad)
        psum = jnp.zeros((Cout, 1), jnp.float32)
        psq = jnp.zeros((Cout, 1), jnp.float32)

        for b in range(B_tile):                        # small static unroll
            x_img = x_ref[b]                           # (Cin, Lpad), lane-dense
            # Patch matrix P(K, Lpad): row (tap, c) is channel c's flat row
            # rotated left by the tap offset — XLU lane rolls, no relayouts,
            # no transposes.
            taps = []
            for kh in range(KH):
                for kw in range(KW):
                    s = dilation * (kh * Wp + kw)
                    if s == 0:
                        taps.append(x_img)
                    else:
                        taps.append(pltpu.roll(x_img, shift=Lpad - s, axis=1))
            pmat = jnp.concatenate(taps, axis=0)       # (K, Lpad)

            # One MXU matmul per image; output already channels-major and
            # lane-dense: (Cout, K) @ (K, Lpad) -> (Cout, Lpad).
            y = jnp.dot(w_cm, pmat, preferred_element_type=jnp.float32)

            ym = y * mask                              # zero the garbage columns
            psum = psum + jnp.sum(ym, axis=1, keepdims=True)
            psq = psq + jnp.sum(ym * ym, axis=1, keepdims=True)

            c0 = pl.multiple_of((step * B_tile + b) * Lpad, LANE)
            o_ref[:, pl.ds(c0, Lpad)] = y              # stays resident in VMEM

        sum_ref[...] += psum
        sq_ref[...] += psq

        # ---- last step: finish batch stats, apply BN + ReLU chunk-by-chunk ----
        @pl.when(step == pl.num_programs(0) - 1)
        def _finish():
            inv_m = 1.0 / float(M)
            mean = sum_ref[...] * inv_m                          # (Cout, 1)
            var = jnp.maximum(sq_ref[...] * inv_m - mean * mean, 0.0)
            scale = g_ref[...] * lax.rsqrt(var + eps)
            shift = b_ref[...] - mean * scale

            def apply_chunk(i, carry):
                c0 = pl.multiple_of(i * Lpad, LANE)
                yb = o_ref[:, pl.ds(c0, Lpad)]
                o_ref[:, pl.ds(c0, Lpad)] = jnp.maximum(yb * scale + shift, 0.0)
                return carry

            lax.fori_loop(0, N, apply_chunk, 0)

    flops = 2 * M * K * Cout + 6 * M * Cout
    bytes_accessed = (x_flat.size + w_mat.size + mask_row.size
                      + 2 * Cout + Cout * TOTW) * 4

    out_wide = pl.pallas_call(
        kernel,
        out_shape=jax.ShapeDtypeStruct((Cout, TOTW), jnp.float32),
        grid_spec=pltpu.PrefetchScalarGridSpec(
            num_scalar_prefetch=0,
            grid=(steps,),
            in_specs=[
                pl.BlockSpec((B_tile, Cin, Lpad), lambda n: (n, 0, 0)),
                pl.BlockSpec((Cout, K), lambda n: (0, 0)),
                pl.BlockSpec((Cout, 1), lambda n: (0, 0)),
                pl.BlockSpec((Cout, 1), lambda n: (0, 0)),
                pl.BlockSpec((1, Lpad), lambda n: (0, 0)),
            ],
            out_specs=pl.BlockSpec((Cout, TOTW), lambda n: (0, 0)),
            scratch_shapes=[pltpu.VMEM((Cout, 1), jnp.float32),
                            pltpu.VMEM((Cout, 1), jnp.float32)],
        ),
        compiler_params=pltpu.CompilerParams(
            # Resident output + in-kernel stats need a sequential grid.
            dimension_semantics=("arbitrary",),
            vmem_limit_bytes=vmem_limit),
        cost_estimate=pl.CostEstimate(flops=flops,
                                      transcendentals=Cout,
                                      bytes_accessed=bytes_accessed),
    )(x_flat, w_mat, g_col, b_col, mask_row)

    # ---- glue: (Cout, N*Lpad) wide slab -> NCHW, dropping the pad columns ----
    out = out_wide.reshape(Cout, N, Lpad)[:, :, :OHWp]
    out = out.reshape(Cout, N, OH, Wp)[:, :, :, :OW]
    return jnp.transpose(out, (1, 0, 2, 3))


# ---------------------------------------------------------------------------
# Pure-JAX reference (PyTorch training-mode semantics) for verification
# ---------------------------------------------------------------------------
def conv_bn_relu_ref(x, w, gamma, beta, *, stride, padding, dilation, eps=1e-5):
    y = lax.conv_general_dilated(
        x, w,
        window_strides=(stride, stride),
        padding=((padding, padding), (padding, padding)),
        rhs_dilation=(dilation, dilation),
        dimension_numbers=("NCHW", "OIHW", "NCHW"))
    mean = jnp.mean(y, axis=(0, 2, 3), keepdims=True)
    var = jnp.mean((y - mean) ** 2, axis=(0, 2, 3), keepdims=True)   # biased
    yn = (y - mean) / jnp.sqrt(var + eps)
    yn = yn * gamma.reshape(1, -1, 1, 1) + beta.reshape(1, -1, 1, 1)
    return jnp.maximum(yn, 0.0)


if __name__ == "__main__":
    key = jax.random.PRNGKey(0)
    k_x, k_w, k_g, k_b = jax.random.split(key, 4)

    # small shapes consistent with a conv(in=4, out=8, k=3, stride=1, pad=1) block
    N, Cin, H, W = 2, 4, 16, 16
    Cout, KH, KW = 8, 3, 3
    stride, padding, dilation = 1, 1, 1

    x = jax.random.normal(k_x, (N, Cin, H, W), dtype=jnp.float32)
    fan_in = Cin * KH * KW
    w = jax.random.uniform(k_w, (Cout, Cin, KH, KW), dtype=jnp.float32,
                           minval=-1.0, maxval=1.0) / jnp.sqrt(fan_in)
    gamma = 1.0 + 0.1 * jax.random.normal(k_g, (Cout,), dtype=jnp.float32)
    beta = 0.1 * jax.random.normal(k_b, (Cout,), dtype=jnp.float32)

    out = conv_bn_relu(x, w, gamma, beta,
                       stride=stride, padding=padding, dilation=dilation)
    out = jax.block_until_ready(out)

    ref = conv_bn_relu_ref(x, w, gamma, beta,
                           stride=stride, padding=padding, dilation=dilation)
    assert out.shape == ref.shape, (out.shape, ref.shape)
    assert jnp.allclose(out, ref, atol=2e-4, rtol=2e-4), (
        float(jnp.max(jnp.abs(out - ref))))

    print("KERNEL_OK")
</pallas_src>

<mosaic_0001>
module attributes {stable_mosaic.version = 11 : i64} {
  func.func @kernel(%arg0: i32, %arg1: memref<2x4x384xf32, #tpu.memory_space<vmem>>, %arg2: memref<8x36xf32, #tpu.memory_space<vmem>>, %arg3: memref<8x1xf32, #tpu.memory_space<vmem>>, %arg4: memref<8x1xf32, #tpu.memory_space<vmem>>, %arg5: memref<1x384xf32, #tpu.memory_space<vmem>>, %arg6: memref<8x768xf32, #tpu.memory_space<vmem>>, %arg7: memref<8x1xf32, #tpu.memory_space<vmem>>, %arg8: memref<8x1xf32, #tpu.memory_space<vmem>>) attributes {dimension_semantics = [#tpu.dimension_semantics<arbitrary>], iteration_bounds = array<i64: 1>, scalar_prefetch = 0 : i64, scratch_operands = 2 : i64, tpu.core_type = #tpu.core_type<tc>, window_params = [{transform_indices = @transform_0, window_bounds = array<i64: 2, 4, 384>}, {pipeline_mode = #tpu.pipeline_mode<synchronous>, transform_indices = @transform_1, window_bounds = array<i64: 8, 36>}, {pipeline_mode = #tpu.pipeline_mode<synchronous>, transform_indices = @transform_2, window_bounds = array<i64: 8, 1>}, {pipeline_mode = #tpu.pipeline_mode<synchronous>, transform_indices = @transform_3, window_bounds = array<i64: 8, 1>}, {pipeline_mode = #tpu.pipeline_mode<synchronous>, transform_indices = @transform_4, window_bounds = array<i64: 1, 384>}, {pipeline_mode = #tpu.pipeline_mode<synchronous>, transform_indices = @transform_5, window_bounds = array<i64: 8, 768>}]} {
    %c0_i32 = arith.constant 0 : i32
    %0 = arith.cmpi eq, %arg0, %c0_i32 : i32
    %1 = arith.extui %0 : i1 to i32
    %c0_i32_0 = arith.constant 0 : i32
    %2 = arith.cmpi ne, %1, %c0_i32_0 : i32
    scf.if %2 {
      %cst_39 = arith.constant 0.000000e+00 : f32
      %70 = vector.broadcast %cst_39 : f32 to vector<8x1xf32>
      %c0_40 = arith.constant 0 : index
      %c0_41 = arith.constant 0 : index
      %71 = vector.load %arg7[%c0_40, %c0_41] : memref<8x1xf32, #tpu.memory_space<vmem>>, vector<8x1xf32>
      tpu.vector_store %arg7[%c0_40, %c0_41], %70 {strides = array<i32>} : memref<8x1xf32, #tpu.memory_space<vmem>>, vector<8x1xf32>,
      %cst_42 = arith.constant 0.000000e+00 : f32
      %72 = vector.broadcast %cst_42 : f32 to vector<8x1xf32>
      %c0_43 = arith.constant 0 : index
      %c0_44 = arith.constant 0 : index
      %73 = vector.load %arg8[%c0_43, %c0_44] : memref<8x1xf32, #tpu.memory_space<vmem>>, vector<8x1xf32>
      tpu.vector_store %arg8[%c0_43, %c0_44], %72 {strides = array<i32>} : memref<8x1xf32, #tpu.memory_space<vmem>>, vector<8x1xf32>,
    } else {
    }
    %c0 = arith.constant 0 : index
    %c0_1 = arith.constant 0 : index
    %3 = vector.load %arg2[%c0, %c0_1] : memref<8x36xf32, #tpu.memory_space<vmem>>, vector<8x36xf32>
    %c0_2 = arith.constant 0 : index
    %c0_3 = arith.constant 0 : index
    %4 = vector.load %arg5[%c0_2, %c0_3] : memref<1x384xf32, #tpu.memory_space<vmem>>, vector<1x384xf32>
    %cst = arith.constant 0.000000e+00 : f32
    %5 = vector.broadcast %cst : f32 to vector<8x1xf32>
    %cst_4 = arith.constant 0.000000e+00 : f32
    %6 = vector.broadcast %cst_4 : f32 to vector<8x1xf32>
    %c0_5 = arith.constant 0 : index
    %c0_6 = arith.constant 0 : index
    %c0_7 = arith.constant 0 : index
    %7 = vector.load %arg1[%c0_5, %c0_6, %c0_7] : memref<2x4x384xf32, #tpu.memory_space<vmem>>, vector<1x4x384xf32>
    %8 = vector.shape_cast %7 : vector<1x4x384xf32> to vector<4x384xf32>
    %c383_i32 = arith.constant 383 : i32
    %9 = tpu.dynamic_rotate %8 by %c383_i32 dim 1 : vector<4x384xf32>, i32 -> vector<4x384xf32>
    %c382_i32 = arith.constant 382 : i32
    %10 = tpu.dynamic_rotate %8 by %c382_i32 dim 1 : vector<4x384xf32>, i32 -> vector<4x384xf32>
    %c366_i32 = arith.constant 366 : i32
    %11 = tpu.dynamic_rotate %8 by %c366_i32 dim 1 : vector<4x384xf32>, i32 -> vector<4x384xf32>
    %c365_i32 = arith.constant 365 : i32
    %12 = tpu.dynamic_rotate %8 by %c365_i32 dim 1 : vector<4x384xf32>, i32 -> vector<4x384xf32>
    %c364_i32 = arith.constant 364 : i32
    %13 = tpu.dynamic_rotate %8 by %c364_i32 dim 1 : vector<4x384xf32>, i32 -> vector<4x384xf32>
    %c348_i32 = arith.constant 348 : i32
    %14 = tpu.dynamic_rotate %8 by %c348_i32 dim 1 : vector<4x384xf32>, i32 -> vector<4x384xf32>
    %c347_i32 = arith.constant 347 : i32
    %15 = tpu.dynamic_rotate %8 by %c347_i32 dim 1 : vector<4x384xf32>, i32 -> vector<4x384xf32>
    %c346_i32 = arith.constant 346 : i32
    %16 = tpu.dynamic_rotate %8 by %c346_i32 dim 1 : vector<4x384xf32>, i32 -> vector<4x384xf32>
    %17 = tpu.concatenate %8, %9, %10, %11, %12, %13, %14, %15, %16 in 0 : vector<4x384xf32>, vector<4x384xf32>, vector<4x384xf32>, vector<4x384xf32>, vector<4x384xf32>, vector<4x384xf32>, vector<4x384xf32>, vector<4x384xf32>, vector<4x384xf32> -> vector<36x384xf32>
    %cst_8 = arith.constant dense<0.000000e+00> : vector<8x384xf32>
    %18 = tpu.matmul %3, %17, %cst_8 {dimension_numbers = #tpu.dot_dimension_numbers<[1], [0], [0], [1], [0, 0, 1, 1], [], []>} : vector<8x36xf32>, vector<36x384xf32>, vector<8x384xf32> -> vector<8x384xf32>
    %19 = vector.broadcast %4 : vector<1x384xf32> to vector<8x384xf32>
    %20 = arith.mulf %18, %19 : vector<8x384xf32>
    %cst_9 = arith.constant dense<0.000000e+00> : vector<8xf32>
    %21 = vector.multi_reduction <add>, %20, %cst_9 [1] : vector<8x384xf32> to vector<8xf32>
    %22 = vector.shape_cast %21 : vector<8xf32> to vector<8x1xf32>
    %23 = arith.addf %5, %22 : vector<8x1xf32>
    %24 = arith.mulf %20, %20 : vector<8x384xf32>
    %cst_10 = arith.constant dense<0.000000e+00> : vector<8xf32>
    %25 = vector.multi_reduction <add>, %24, %cst_10 [1] : vector<8x384xf32> to vector<8xf32>
    %26 = vector.shape_cast %25 : vector<8xf32> to vector<8x1xf32>
    %27 = arith.addf %6, %26 : vector<8x1xf32>
    %c2_i32 = arith.constant 2 : i32
    %28 = arith.muli %arg0, %c2_i32 : i32
    %c0_i32_11 = arith.constant 0 : i32
    %29 = arith.addi %28, %c0_i32_11 : i32
    %c384_i32 = arith.constant 384 : i32
    %30 = arith.muli %29, %c384_i32 : i32
    %31 = tpu.assume_multiple %30, 128 : i32
    %c0_12 = arith.constant 0 : index
    %32 = arith.index_cast %31 : i32 to index
    %33 = vector.load %arg6[%c0_12, %32] : memref<8x768xf32, #tpu.memory_space<vmem>>, vector<8x384xf32>
    tpu.vector_store %arg6[%c0_12, %32], %18 {strides = array<i32>} : memref<8x768xf32, #tpu.memory_space<vmem>>, vector<8x384xf32>,
    %c1 = arith.constant 1 : index
    %c0_13 = arith.constant 0 : index
    %c0_14 = arith.constant 0 : index
    %34 = vector.load %arg1[%c1, %c0_13, %c0_14] : memref<2x4x384xf32, #tpu.memory_space<vmem>>, vector<1x4x384xf32>
    %35 = vector.shape_cast %34 : vector<1x4x384xf32> to vector<4x384xf32>
    %c383_i32_15 = arith.constant 383 : i32
    %36 = tpu.dynamic_rotate %35 by %c383_i32_15 dim 1 : vector<4x384xf32>, i32 -> vector<4x384xf32>
    %c382_i32_16 = arith.constant 382 : i32
    %37 = tpu.dynamic_rotate %35 by %c382_i32_16 dim 1 : vector<4x384xf32>, i32 -> vector<4x384xf32>
    %c366_i32_17 = arith.constant 366 : i32
    %38 = tpu.dynamic_rotate %35 by %c366_i32_17 dim 1 : vector<4x384xf32>, i32 -> vector<4x384xf32>
    %c365_i32_18 = arith.constant 365 : i32
    %39 = tpu.dynamic_rotate %35 by %c365_i32_18 dim 1 : vector<4x384xf32>, i32 -> vector<4x384xf32>
    %c364_i32_19 = arith.constant 364 : i32
    %40 = tpu.dynamic_rotate %35 by %c364_i32_19 dim 1 : vector<4x384xf32>, i32 -> vector<4x384xf32>
    %c348_i32_20 = arith.constant 348 : i32
    %41 = tpu.dynamic_rotate %35 by %c348_i32_20 dim 1 : vector<4x384xf32>, i32 -> vector<4x384xf32>
    %c347_i32_21 = arith.constant 347 : i32
    %42 = tpu.dynamic_rotate %35 by %c347_i32_21 dim 1 : vector<4x384xf32>, i32 -> vector<4x384xf32>
    %c346_i32_22 = arith.constant 346 : i32
    %43 = tpu.dynamic_rotate %35 by %c346_i32_22 dim 1 : vector<4x384xf32>, i32 -> vector<4x384xf32>
    %44 = tpu.concatenate %35, %36, %37, %38, %39, %40, %41, %42, %43 in 0 : vector<4x384xf32>, vector<4x384xf32>, vector<4x384xf32>, vector<4x384xf32>, vector<4x384xf32>, vector<4x384xf32>, vector<4x384xf32>, vector<4x384xf32>, vector<4x384xf32> -> vector<36x384xf32>
    %cst_23 = arith.constant dense<0.000000e+00> : vector<8x384xf32>
    %45 = tpu.matmul %3, %44, %cst_23 {dimension_numbers = #tpu.dot_dimension_numbers<[1], [0], [0], [1], [0, 0, 1, 1], [], []>} : vector<8x36xf32>, vector<36x384xf32>, vector<8x384xf32> -> vector<8x384xf32>
    %46 = vector.broadcast %4 : vector<1x384xf32> to vector<8x384xf32>
    %47 = arith.mulf %45, %46 : vector<8x384xf32>
    %cst_24 = arith.constant dense<0.000000e+00> : vector<8xf32>
    %48 = vector.multi_reduction <add>, %47, %cst_24 [1] : vector<8x384xf32> to vector<8xf32>
    %49 = vector.shape_cast %48 : vector<8xf32> to vector<8x1xf32>
    %50 = arith.addf %23, %49 : vector<8x1xf32>
    %51 = arith.mulf %47, %47 : vector<8x384xf32>
    %cst_25 = arith.constant dense<0.000000e+00> : vector<8xf32>
    %52 = vector.multi_reduction <add>, %51, %cst_25 [1] : vector<8x384xf32> to vector<8xf32>
    %53 = vector.shape_cast %52 : vector<8xf32> to vector<8x1xf32>
    %54 = arith.addf %27, %53 : vector<8x1xf32>
    %c2_i32_26 = arith.constant 2 : i32
    %55 = arith.muli %arg0, %c2_i32_26 : i32
    %c1_i32 = arith.constant 1 : i32
    %56 = arith.addi %55, %c1_i32 : i32
    %c384_i32_27 = arith.constant 384 : i32
    %57 = arith.muli %56, %c384_i32_27 : i32
    %58 = tpu.assume_multiple %57, 128 : i32
    %c0_28 = arith.constant 0 : index
    %59 = arith.index_cast %58 : i32 to index
    %60 = vector.load %arg6[%c0_28, %59] : memref<8x768xf32, #tpu.memory_space<vmem>>, vector<8x384xf32>
    tpu.vector_store %arg6[%c0_28, %59], %45 {strides = array<i32>} : memref<8x768xf32, #tpu.memory_space<vmem>>, vector<8x384xf32>,
    %c0_29 = arith.constant 0 : index
    %c0_30 = arith.constant 0 : index
    %61 = vector.load %arg7[%c0_29, %c0_30] : memref<8x1xf32, #tpu.memory_space<vmem>>, vector<8x1xf32>
    %62 = arith.addf %61, %50 : vector<8x1xf32>
    %c0_31 = arith.constant 0 : index
    %c0_32 = arith.constant 0 : index
    %63 = vector.load %arg7[%c0_31, %c0_32] : memref<8x1xf32, #tpu.memory_space<vmem>>, vector<8x1xf32>
    tpu.vector_store %arg7[%c0_31, %c0_32], %62 {strides = array<i32>} : memref<8x1xf32, #tpu.memory_space<vmem>>, vector<8x1xf32>,
    %c0_33 = arith.constant 0 : index
    %c0_34 = arith.constant 0 : index
    %64 = vector.load %arg8[%c0_33, %c0_34] : memref<8x1xf32, #tpu.memory_space<vmem>>, vector<8x1xf32>
    %65 = arith.addf %64, %54 : vector<8x1xf32>
    %c0_35 = arith.constant 0 : index
    %c0_36 = arith.constant 0 : index
    %66 = vector.load %arg8[%c0_35, %c0_36] : memref<8x1xf32, #tpu.memory_space<vmem>>, vector<8x1xf32>
    tpu.vector_store %arg8[%c0_35, %c0_36], %65 {strides = array<i32>} : memref<8x1xf32, #tpu.memory_space<vmem>>, vector<8x1xf32>,
    %c0_i32_37 = arith.constant 0 : i32
    %67 = arith.cmpi eq, %arg0, %c0_i32_37 : i32
    %68 = arith.extui %67 : i1 to i32
    %c0_i32_38 = arith.constant 0 : i32
    %69 = arith.cmpi ne, %68, %c0_i32_38 : i32
    scf.if %69 {
      %c0_39 = arith.constant 0 : index
      %c0_40 = arith.constant 0 : index
      %70 = vector.load %arg7[%c0_39, %c0_40] : memref<8x1xf32, #tpu.memory_space<vmem>>, vector<8x1xf32>
      %cst_41 = arith.constant 0.001953125 : f32
      %71 = vector.broadcast %cst_41 : f32 to vector<8x1xf32>
      %72 = arith.mulf %70, %71 : vector<8x1xf32>
      %c0_42 = arith.constant 0 : index
      %c0_43 = arith.constant 0 : index
      %73 = vector.load %arg8[%c0_42, %c0_43] : memref<8x1xf32, #tpu.memory_space<vmem>>, vector<8x1xf32>
      %cst_44 = arith.constant 0.001953125 : f32
      %74 = vector.broadcast %cst_44 : f32 to vector<8x1xf32>
      %75 = arith.mulf %73, %74 : vector<8x1xf32>
      %76 = arith.mulf %72, %72 : vector<8x1xf32>
      %77 = arith.subf %75, %76 : vector<8x1xf32>
      %cst_45 = arith.constant 0.000000e+00 : f32
      %78 = vector.broadcast %cst_45 : f32 to vector<8x1xf32>
      %79 = arith.maximumf %77, %78 : vector<8x1xf32>
      %c0_46 = arith.constant 0 : index
      %c0_47 = arith.constant 0 : index
      %80 = vector.load %arg3[%c0_46, %c0_47] : memref<8x1xf32, #tpu.memory_space<vmem>>, vector<8x1xf32>
      %cst_48 = arith.constant 9.99999974E-6 : f32
      %81 = vector.broadcast %cst_48 : f32 to vector<8x1xf32>
      %82 = arith.addf %79, %81 : vector<8x1xf32>
      %83 = math.rsqrt %82 : vector<8x1xf32>
      %84 = arith.mulf %80, %83 : vector<8x1xf32>
      %c0_49 = arith.constant 0 : index
      %c0_50 = arith.constant 0 : index
      %85 = vector.load %arg4[%c0_49, %c0_50] : memref<8x1xf32, #tpu.memory_space<vmem>>, vector<8x1xf32>
      %86 = arith.mulf %72, %84 : vector<8x1xf32>
      %87 = arith.subf %85, %86 : vector<8x1xf32>
      %c0_i32_51 = arith.constant 0 : i32
      %c2_i32_52 = arith.constant 2 : i32
      %88 = arith.addi %c0_i32_51, %c2_i32_52 : i32
      %c1_i32_53 = arith.constant 1 : i32
      scf.for %arg9 = %c0_i32_51 to %88 step %c1_i32_53  : i32 {
        %c384_i32_55 = arith.constant 384 : i32
        %89 = arith.muli %arg9, %c384_i32_55 : i32
        %90 = tpu.assume_multiple %89, 128 : i32
        %c0_56 = arith.constant 0 : index
        %91 = arith.index_cast %90 : i32 to index
        %92 = vector.load %arg6[%c0_56, %91] : memref<8x768xf32, #tpu.memory_space<vmem>>, vector<8x384xf32>
        %93 = vector.broadcast %84 : vector<8x1xf32> to vector<8x384xf32>
        %94 = arith.mulf %92, %93 : vector<8x384xf32>
        %95 = vector.broadcast %87 : vector<8x1xf32> to vector<8x384xf32>
        %96 = arith.addf %94, %95 : vector<8x384xf32>
        %cst_57 = arith.constant 0.000000e+00 : f32
        %97 = vector.broadcast %cst_57 : f32 to vector<8x384xf32>
        %98 = arith.maximumf %96, %97 : vector<8x384xf32>
        %c0_58 = arith.constant 0 : index
        %99 = arith.index_cast %90 : i32 to index
        %100 = vector.load %arg6[%c0_58, %99] : memref<8x768xf32, #tpu.memory_space<vmem>>, vector<8x384xf32>
        tpu.vector_store %arg6[%c0_58, %99], %98 {strides = array<i32>} : memref<8x768xf32, #tpu.memory_space<vmem>>, vector<8x384xf32>,
      }
      %c2_i32_54 = arith.constant 2 : i32
    } else {
    }
    return
  }
  func.func @transform_0(%arg0: i32) -> (i32, i32, i32) {
    %c0_i32 = arith.constant 0 : i32
    %c0_i32_0 = arith.constant 0 : i32
    %c0_i32_1 = arith.constant 0 : i32
    return %arg0, %c0_i32, %c0_i32_0 : i32, i32, i32
  }
  func.func @transform_1(%arg0: i32) -> (i32, i32) {
    %c0_i32 = arith.constant 0 : i32
    %c0_i32_0 = arith.constant 0 : i32
    %c0_i32_1 = arith.constant 0 : i32
    return %c0_i32, %c0_i32_0 : i32, i32
  }
  func.func @transform_2(%arg0: i32) -> (i32, i32) {
    %c0_i32 = arith.constant 0 : i32
    %c0_i32_0 = arith.constant 0 : i32
    %c0_i32_1 = arith.constant 0 : i32
    return %c0_i32, %c0_i32_0 : i32, i32
  }
  func.func @transform_3(%arg0: i32) -> (i32, i32) {
    %c0_i32 = arith.constant 0 : i32
    %c0_i32_0 = arith.constant 0 : i32
    %c0_i32_1 = arith.constant 0 : i32
    return %c0_i32, %c0_i32_0 : i32, i32
  }
  func.func @transform_4(%arg0: i32) -> (i32, i32) {
    %c0_i32 = arith.constant 0 : i32
    %c0_i32_0 = arith.constant 0 : i32
    %c0_i32_1 = arith.constant 0 : i32
    return %c0_i32, %c0_i32_0 : i32, i32
  }
  func.func @transform_5(%arg0: i32) -> (i32, i32) {
    %c0_i32 = arith.constant 0 : i32
    %c0_i32_0 = arith.constant 0 : i32
    %c0_i32_1 = arith.constant 0 : i32
    return %c0_i32, %c0_i32_0 : i32, i32
  }
}

</mosaic_0001>

<llo_original>
// kernel: conv_bn_relu.1
$region0: #{conv_bn_relu.1}
  #allocation0 [shape = 'u32[]', space=smem, size = 0x4, offset = 0x4, fixed_abs, tag = 'smem constant byte address 0x4 - core index']
  #allocation1 [shape = 'u32[144,128]{1,0:T(1,128)}', space=vmem, size = 0x12000, scoped, tag = 'internal scratch']
  #allocation2 [shape = 'f32[8,1]{1,0:T(8,128)}', space=vmem, size = 0x1000, scoped, tag = 'scratch operand']
  #allocation3 [shape = 'f32[8,1]{1,0:T(8,128)}', space=vmem, size = 0x1000, scoped, tag = 'scratch operand']
  %s0 = inlined_call_operand.vmem [shape: f32[2,4,384], index: 0, kind: input, shape index: {}]
  %s1 = inlined_call_operand.vmem [shape: f32[8,36], index: 1, kind: input, shape index: {}]
  %s2 = inlined_call_operand.vmem [shape: f32[8,1], index: 2, kind: input, shape index: {}]
  %s3 = inlined_call_operand.vmem [shape: f32[8,1], index: 3, kind: input, shape index: {}]
  %s4 = inlined_call_operand.vmem [shape: f32[1,384], index: 4, kind: input, shape index: {}]
  %s5 = inlined_call_operand.vmem [shape: f32[8,768], index: 5, kind: output, shape index: {}]
  %s6 = sld [smem:[#allocation0]]
  $region45: #{conv_bn_relu.1} parent=0
    _
  %s8 = ssub.s32 1, %s6
  %s9 = scalar_select 0, %s8, %s6
  // Predicated region
  $region2: #{conv_bn_relu.1} parent=0 // pred_check
    _
  $region3: #{conv_bn_relu.1} parent=0 // pred_check_branch
    %11 = sbr.rel (0) target = $region5
  $region4: #{conv_bn_relu.1} parent=0 // pred_region
    _
  $region5: #{conv_bn_relu.1} parent=0 // pred_fallthru
    _
  // Predicated region
  $region6: #{conv_bn_relu.1} parent=0 // pred_check
    _
  $region7: #{conv_bn_relu.1} parent=0 // pred_check_branch
    %13 = sbr.rel (0) target = $region9
  $region8: #{conv_bn_relu.1} parent=0 // pred_region
    _
  $region9: #{conv_bn_relu.1} parent=0 // pred_fallthru
    _
  // Predicated region
  $region10: #{conv_bn_relu.1} parent=0 // pred_check
    _
  $region11: #{conv_bn_relu.1} parent=0 // pred_check_branch
    %15 = sbr.rel (0) target = $region13
  $region12: #{conv_bn_relu.1} parent=0 // pred_region
    _
  $region13: #{conv_bn_relu.1} parent=0 // pred_fallthru
    _
  // Predicated region
  $region14: #{conv_bn_relu.1} parent=0 // pred_check
    _
  $region15: #{conv_bn_relu.1} parent=0 // pred_check_branch
    %17 = sbr.rel (0) target = $region17
  $region16: #{conv_bn_relu.1} parent=0 // pred_region
    _
  $region17: #{conv_bn_relu.1} parent=0 // pred_fallthru
    _
  // Predicated region
  $region18: #{conv_bn_relu.1} parent=0 // pred_check
    _
  $region19: #{conv_bn_relu.1} parent=0 // pred_check_branch
    %19 = sbr.rel (0) target = $region21
  $region20: #{conv_bn_relu.1} parent=0 // pred_region
    _
  $region21: #{conv_bn_relu.1} parent=0 // pred_fallthru
    _
  %p20 = scmp.eq.s32.totalorder 0, 0
  // Predicated region
  $region22: #{conv_bn_relu.1} parent=0 // pred_check
    %p21 = pneg %p20
  $region23: #{conv_bn_relu.1} parent=0 // pred_check_branch
    %23 = sbr.rel (%p21) target = $region25
  $region24: #{conv_bn_relu.1} parent=0 // pred_region
    %vm24 = vcmask 7168
    %25 = vst.msk [vmem:[#allocation2] sm:$0xff] %vm24, 0.0
    %26 = vst.msk [vmem:[#allocation3] sm:$0xff] %vm24, 0.0
  $region25: #{conv_bn_relu.1} parent=0 // pred_fallthru
    _
  %v27 = vld [vmem:[%s1] sm:$0xff]
  %v28 = vld [vmem:[%s4] sm:$0x7]
  %v29 = vld [vmem:[%s0] sm:$0xff]
  %v30 = vld [vmem:[%s0 + $0x8] sm:$0xf]
  %v32 = vcombine.high %v29, %v29
  %34 = vrot.lane.b32.xlu0 %v29, 127
  %v35 = vpop.permute.xlu0 %34
  %36 = vrot.lane.b32.xlu0 %v32, 127
  %v37 = vpop.permute.xlu0 %36
  %38 = vrot.lane.b32.xlu0 %v30, 127
  %v39 = vpop.permute.xlu0 %38
  %v40 = vlaneseq
  %v41 = vand.u32 %v40, 127
  %vm42 = vcmp.lt.s32.totalorder %v41, 127
  %v43 = vsel %vm42, %v37, %v39
  %v44 = vsel %vm42, %v35, %v37
  %v45 = vsel %vm42, %v39, %v35
  %46 = vrot.lane.b32.xlu0 %v29, 126
  %v47 = vpop.permute.xlu0 %46
  %48 = vrot.lane.b32.xlu0 %v32, 126
  %v49 = vpop.permute.xlu0 %48
  %50 = vrot.lane.b32.xlu0 %v30, 126
  %v51 = vpop.permute.xlu0 %50
  %vm52 = vcmp.lt.s32.totalorder %v41, 126
  %v53 = vsel %vm52, %v49, %v51
  %v54 = vsel %vm52, %v47, %v49
  %v55 = vsel %vm52, %v51, %v47
  %56 = vrot.lane.b32.xlu0 %v29, 110
  %v57 = vpop.permute.xlu0 %56
  %58 = vrot.lane.b32.xlu0 %v32, 110
  %v59 = vpop.permute.xlu0 %58
  %60 = vrot.lane.b32.xlu0 %v30, 110
  %v61 = vpop.permute.xlu0 %60
  %vm62 = vcmp.lt.s32.totalorder %v41, 110
  %v63 = vsel %vm62, %v59, %v61
  %v64 = vsel %vm62, %v57, %v59
  %v65 = vsel %vm62, %v61, %v57
  %66 = vrot.lane.b32.xlu0 %v29, 109
  %v67 = vpop.permute.xlu0 %66
  %68 = vrot.lane.b32.xlu0 %v32, 109
  %v69 = vpop.permute.xlu0 %68
  %70 = vrot.lane.b32.xlu0 %v30, 109
  %v71 = vpop.permute.xlu0 %70
  %vm72 = vcmp.lt.s32.totalorder %v41, 109
  %v73 = vsel %vm72, %v69, %v71
  %v74 = vsel %vm72, %v67, %v69
  %v75 = vsel %vm72, %v71, %v67
  %76 = vrot.lane.b32.xlu0 %v29, 108
  %v77 = vpop.permute.xlu0 %76
  %78 = vrot.lane.b32.xlu0 %v32, 108
  %v79 = vpop.permute.xlu0 %78
  %80 = vrot.lane.b32.xlu0 %v30, 108
  %v81 = vpop.permute.xlu0 %80
  %vm82 = vcmp.lt.s32.totalorder %v41, 108
  %v83 = vsel %vm82, %v79, %v81
  %v84 = vsel %vm82, %v77, %v79
  %v85 = vsel %vm82, %v81, %v77
  %86 = vrot.lane.b32.xlu0 %v29, 92
  %v87 = vpop.permute.xlu0 %86
  %88 = vrot.lane.b32.xlu0 %v32, 92
  %v89 = vpop.permute.xlu0 %88
  %90 = vrot.lane.b32.xlu0 %v30, 92
  %v91 = vpop.permute.xlu0 %90
  %vm92 = vcmp.lt.s32.totalorder %v41, 92
  %v93 = vsel %vm92, %v89, %v91
  %v94 = vsel %vm92, %v87, %v89
  %v95 = vsel %vm92, %v91, %v87
  %96 = vrot.lane.b32.xlu0 %v29, 91
  %v97 = vpop.permute.xlu0 %96
  %98 = vrot.lane.b32.xlu0 %v32, 91
  %v99 = vpop.permute.xlu0 %98
  %100 = vrot.lane.b32.xlu0 %v30, 91
  %v101 = vpop.permute.xlu0 %100
  %vm102 = vcmp.lt.s32.totalorder %v41, 91
  %v103 = vsel %vm102, %v99, %v101
  %v104 = vsel %vm102, %v97, %v99
  %v105 = vsel %vm102, %v101, %v97
  %106 = vrot.lane.b32.xlu0 %v29, 90
  %v107 = vpop.permute.xlu0 %106
  %108 = vrot.lane.b32.xlu0 %v32, 90
  %v109 = vpop.permute.xlu0 %108
  %110 = vrot.lane.b32.xlu0 %v30, 90
  %v111 = vpop.permute.xlu0 %110
  %vm112 = vcmp.lt.s32.totalorder %v41, 90
  %v113 = vsel %vm112, %v109, %v111
  %v114 = vsel %vm112, %v107, %v109
  %v115 = vsel %vm112, %v111, %v107
  %v119 = vrot.slane %v44, 4
  %v120 = vrot.slane %v43, 4
  %v121 = vrot.slane %v45, 4
  %v128 = vrot.slane %v64, 4
  %v129 = vrot.slane %v63, 4
  %v130 = vrot.slane %v65, 4
  %v137 = vrot.slane %v84, 4
  %v138 = vrot.slane %v83, 4
  %v139 = vrot.slane %v85, 4
  %v146 = vrot.slane %v104, 4
  %v147 = vrot.slane %v103, 4
  %v148 = vrot.slane %v105, 4
  %vm152 = vcmask 1043456
  %v153 = vsel %vm152, %v29, %v119
  %v154 = vsel %vm152, %v32, %v120
  %v155 = vsel %vm152, %v30, %v121
  %v156 = vsel %vm152, %v54, %v128
  %v157 = vsel %vm152, %v53, %v129
  %v158 = vsel %vm152, %v55, %v130
  %v159 = vsel %vm152, %v74, %v137
  %v160 = vsel %vm152, %v73, %v138
  %v161 = vsel %vm152, %v75, %v139
  %v162 = vsel %vm152, %v94, %v146
  %v163 = vsel %vm152, %v93, %v147
  %v164 = vsel %vm152, %v95, %v148
  %vm165 = vcmask 293888
  %v167 = vsel %vm165, %v27, 0
  %v170 = vsel %vm152, %v114, 0
  %v173 = vsel %vm152, %v113, 0
  %v176 = vsel %vm152, %v115, 0
  %178 = vmatprep.subr.mxu0 %v154
  %179 = vmatpush1.msra.mxu0 %v153
  %180 = vmatprep.subr.mxu0 %v157
  %181 = vmatpush1.msra.mxu0 %v156
  %182 = vmatprep.subr.mxu0 %v160
  %183 = vmatpush1.msra.mxu0 %v159
  %184 = vmatprep.subr.mxu0 %v163
  %185 = vmatpush1.msra.mxu0 %v162
  %186 = vmatprep.subr.mxu0 %v173
  %187 = vmatpush1.msra.mxu0 %v170
  %188 = vmatprep.subr.mxu0 0.0
  %189 = vmatpush1.msra.mxu0 0.0
  %190 = vmatprep.subr.mxu0 0.0
  %191 = vmatpush1.msra.mxu0 0.0
  %192 = vmatprep.subr.mxu0 0.0
  %193 = vmatpush1.msra.mxu0 0.0
  %194 = vmatprep.subr.mxu0 0.0
  %195 = vmatpush1.msra.mxu0 0.0
  %196 = vmatprep.subr.mxu0 0.0
  %197 = vmatpush1.msra.mxu0 0.0
  %198 = vmatprep.subr.mxu0 0.0
  %199 = vmatpush1.msra.mxu0 0.0
  %200 = vmatprep.subr.mxu0 0.0
  %201 = vmatpush1.msra.mxu0 0.0
  %202 = vmatprep.subr.mxu0 0.0
  %203 = vmatpush1.msra.mxu0 0.0
  %204 = vmatprep.subr.mxu0 0.0
  %205 = vmatpush1.msra.mxu0 0.0
  %206 = vmatprep.subr.mxu0 0.0
  %207 = vmatpush1.msra.mxu0 0.0
  %208 = vmatprep.subr.mxu0 0.0
  %209 = vmatpush1.msra.mxu0 0.0
  %210 = vmatprep.subr.mxu0 0.0
  %211 = vmatpush1.msra.mxu0 0.0
  %212 = vmatprep.subr.mxu0 0.0
  %213 = vmatpush1.msra.mxu0 0.0
  %214 = vmatprep.subr.mxu0 0.0
  %215 = vmatpush1.msra.mxu0 0.0
  %216 = vmatprep.subr.mxu0 0.0
  %217 = vmatpush1.msra.mxu0 0.0
  %218 = vmatprep.subr.mxu0 0.0
  %219 = vmatpush1.msra.mxu0 0.0
  %220 = vmatprep.subr.mxu0 0.0
  %221 = vmatpush1.msra.mxu0 0.0
  %222 = vmatprep.subr.mxu0 0.0
  %223 = vmatpush1.msra.mxu0 0.0
  %224 = vmatprep.subr.mxu0 0.0
  %225 = vmatpush1.msra.mxu0 0.0
  %226 = vmatprep.subr.mxu0 0.0
  %227 = vmatpush1.msra.mxu0 0.0
  %228 = vmatprep.subr.mxu0 0.0
  %229 = vmatpush1.msra.mxu0 0.0
  %230 = vmatprep.subr.mxu0 0.0
  %231 = vmatpush1.msra.mxu0 0.0
  %232 = vmatprep.subr.mxu0 0.0
  %233 = vmatpush1.msra.mxu0 0.0
  %234 = vmatprep.subr.mxu0 0.0
  %235 = vmatpush1.msra.mxu0 0.0
  %236 = vmatprep.subr.mxu0 0.0
  %237 = vmatpush1.msra.mxu0 0.0
  %238 = vmatprep.subr.mxu0 0.0
  %239 = vmatpush1.msra.mxu0 0.0
  %240 = vmatprep.subr.mxu0 0.0
  %241 = vmatpush1.msra.mxu0 0.0
  %242 = vmatprep.mubr.f32.mxu0 0.0
  %243 = vmatmul.mubr.f32.gmra.mrb[0].mxu0 %v167
  %v244 = vpop.f32.mrb[0].mxu0
  %v245 = vadd.f32 0.0, %v244
  %v246 = vpop.f32.mrb[0].mxu0
  %v247 = vadd.f32 0.0, %v246
  %248 = vdwg.mxu0
  %249 = vmatprep.subr.mxu0 0.0
  %250 = vmatpush1.msra.mxu0 %v155
  %251 = vmatprep.subr.mxu0 0.0
  %252 = vmatpush1.msra.mxu0 %v158
  %253 = vmatprep.subr.mxu0 0.0
  %254 = vmatpush1.msra.mxu0 %v161
  %255 = vmatprep.subr.mxu0 0.0
  %256 = vmatpush1.msra.mxu0 %v164
  %257 = vmatprep.subr.mxu0 0.0
  %258 = vmatpush1.msra.mxu0 %v176
  %259 = vmatprep.subr.mxu0 0.0
  %260 = vmatpush1.msra.mxu0 0.0
  %261 = vmatprep.subr.mxu0 0.0
  %262 = vmatpush1.msra.mxu0 0.0
  %263 = vmatprep.subr.mxu0 0.0
  %264 = vmatpush1.msra.mxu0 0.0
  %265 = vmatprep.subr.mxu0 0.0
  %266 = vmatpush1.msra.mxu0 0.0
  %267 = vmatprep.subr.mxu0 0.0
  %268 = vmatpush1.msra.mxu0 0.0
  %269 = vmatprep.subr.mxu0 0.0
  %270 = vmatpush1.msra.mxu0 0.0
  %271 = vmatprep.subr.mxu0 0.0
  %272 = vmatpush1.msra.mxu0 0.0
  %273 = vmatprep.subr.mxu0 0.0
  %274 = vmatpush1.msra.mxu0 0.0
  %275 = vmatprep.subr.mxu0 0.0
  %276 = vmatpush1.msra.mxu0 0.0
  %277 = vmatprep.subr.mxu0 0.0
  %278 = vmatpush1.msra.mxu0 0.0
  %279 = vmatprep.subr.mxu0 0.0
  %280 = vmatpush1.msra.mxu0 0.0
  %281 = vmatprep.subr.mxu0 0.0
  %282 = vmatpush1.msra.mxu0 0.0
  %283 = vmatprep.subr.mxu0 0.0
  %284 = vmatpush1.msra.mxu0 0.0
  %285 = vmatprep.subr.mxu0 0.0
  %286 = vmatpush1.msra.mxu0 0.0
  %287 = vmatprep.subr.mxu0 0.0
  %288 = vmatpush1.msra.mxu0 0.0
  %289 = vmatprep.subr.mxu0 0.0
  %290 = vmatpush1.msra.mxu0 0.0
  %291 = vmatprep.subr.mxu0 0.0
  %292 = vmatpush1.msra.mxu0 0.0
  %293 = vmatprep.subr.mxu0 0.0
  %294 = vmatpush1.msra.mxu0 0.0
  %295 = vmatprep.subr.mxu0 0.0
  %296 = vmatpush1.msra.mxu0 0.0
  %297 = vmatprep.subr.mxu0 0.0
  %298 = vmatpush1.msra.mxu0 0.0
  %299 = vmatprep.subr.mxu0 0.0
  %300 = vmatpush1.msra.mxu0 0.0
  %301 = vmatprep.subr.mxu0 0.0
  %302 = vmatpush1.msra.mxu0 0.0
  %303 = vmatprep.subr.mxu0 0.0
  %304 = vmatpush1.msra.mxu0 0.0
  %305 = vmatprep.subr.mxu0 0.0
  %306 = vmatpush1.msra.mxu0 0.0
  %307 = vmatprep.subr.mxu0 0.0
  %308 = vmatpush1.msra.mxu0 0.0
  %309 = vmatprep.subr.mxu0 0.0
  %310 = vmatpush1.msra.mxu0 0.0
  %311 = vmatprep.subr.mxu0 0.0
  %312 = vmatpush1.msra.mxu0 0.0
  %313 = vmatprep.mubr.f32.mxu0 0.0
  %314 = vmatmul.mubr.f32.gmra.mrb[0].mxu0 %v167
  %v315 = vpop.f32.mrb[0].mxu0
  %v316 = vadd.f32 0.0, %v315
  %v317 = vpop.f32.mrb[0].mxu0
  %318 = vdwg.mxu0
  %v320 = vlaneseq
  %v321 = vshrl.u32 %v320, 7
  %v322 = vsub.s32 0, %v321
  %v323 = vrot.slane %v28, %v322
  %v324 = vlaneseq
  %v325 = vshrl.u32 %v324, 7
  %v326 = vsub.s32 1, %v325
  %v327 = vrot.slane %v28, %v326
  %v328 = vlaneseq
  %v329 = vshrl.u32 %v328, 7
  %v330 = vsub.s32 2, %v329
  %v331 = vrot.slane %v28, %v330
  %v335 = vmul.f32 %v245, %v323
  %v336 = vmul.f32 %v247, %v327
  %v337 = vmul.f32 %v316, %v331
  %v338 = vadd.f32 %v335, %v336
  %v339 = vadd.f32 %v338, %v337
  %340 = vadd.xlane.f32.xlu0 %v339
  %v341 = vpop.xlane.xlu0 %340
  %v342 = vadd.f32 %v341, 0.0
  %v343 = vmul.f32 %v335, %v335
  %v344 = vmul.f32 %v336, %v336
  %v345 = vmul.f32 %v337, %v337
  %v346 = vadd.f32 %v343, %v344
  %v347 = vadd.f32 %v346, %v345
  %348 = vadd.xlane.f32.xlu0 %v347
  %v349 = vpop.xlane.xlu0 %348
  %v350 = vadd.f32 %v349, 0.0
  %s351 = smul.u32 0, 768
  %s352 = sshra.s32 %s351, 7
  %s353 = sand.u32 %s351, 127
  %s354 = smul.addr %s352, 8
  %s355 = scalar_lea.vmem %s5, %s354
  %356 = vst [vmem:[%s355] sm:$0xff] %v245
  %357 = vst [vmem:[%s355 + $0x8] sm:$0xff] %v247
  %358 = vst [vmem:[%s355 + $0x10] sm:$0xff] %v316
  %s359 = scalar_lea.vmem %s0, 12
  %v360 = vld [vmem:[%s359] sm:$0xff]
  %v361 = vld [vmem:[%s359 + $0x8] sm:$0xf]
  %v363 = vcombine.high %v360, %v360
  %365 = vrot.lane.b32.xlu0 %v360, 127
  %v366 = vpop.permute.xlu0 %365
  %367 = vrot.lane.b32.xlu0 %v363, 127
  %v368 = vpop.permute.xlu0 %367
  %369 = vrot.lane.b32.xlu0 %v361, 127
  %v370 = vpop.permute.xlu0 %369
  %v371 = vsel %vm42, %v368, %v370
  %v372 = vsel %vm42, %v366, %v368
  %v373 = vsel %vm42, %v370, %v366
  %374 = vrot.lane.b32.xlu0 %v360, 126
  %v375 = vpop.permute.xlu0 %374
  %376 = vrot.lane.b32.xlu0 %v363, 126
  %v377 = vpop.permute.xlu0 %376
  %378 = vrot.lane.b32.xlu0 %v361, 126
  %v379 = vpop.permute.xlu0 %378
  %v380 = vsel %vm52, %v377, %v379
  %v381 = vsel %vm52, %v375, %v377
  %v382 = vsel %vm52, %v379, %v375
  %383 = vrot.lane.b32.xlu0 %v360, 110
  %v384 = vpop.permute.xlu0 %383
  %385 = vrot.lane.b32.xlu0 %v363, 110
  %v386 = vpop.permute.xlu0 %385
  %387 = vrot.lane.b32.xlu0 %v361, 110
  %v388 = vpop.permute.xlu0 %387
  %v389 = vsel %vm62, %v386, %v388
  %v390 = vsel %vm62, %v384, %v386
  %v391 = vsel %vm62, %v388, %v384
  %392 = vrot.lane.b32.xlu0 %v360, 109
  %v393 = vpop.permute.xlu0 %392
  %394 = vrot.lane.b32.xlu0 %v363, 109
  %v395 = vpop.permute.xlu0 %394
  %396 = vrot.lane.b32.xlu0 %v361, 109
  %v397 = vpop.permute.xlu0 %396
  %v398 = vsel %vm72, %v395, %v397
  %v399 = vsel %vm72, %v393, %v395
  %v400 = vsel %vm72, %v397, %v393
  %401 = vrot.lane.b32.xlu0 %v360, 108
  %v402 = vpop.permute.xlu0 %401
  %403 = vrot.lane.b32.xlu0 %v363, 108
  %v404 = vpop.permute.xlu0 %403
  %405 = vrot.lane.b32.xlu0 %v361, 108
  %v406 = vpop.permute.xlu0 %405
  %v407 = vsel %vm82, %v404, %v406
  %v408 = vsel %vm82, %v402, %v404
  %v409 = vsel %vm82, %v406, %v402
  %410 = vrot.lane.b32.xlu0 %v360, 92
  %v411 = vpop.permute.xlu0 %410
  %412 = vrot.lane.b32.xlu0 %v363, 92
  %v413 = vpop.permute.xlu0 %412
  %414 = vrot.lane.b32.xlu0 %v361, 92
  %v415 = vpop.permute.xlu0 %414
  %v416 = vsel %vm92, %v413, %v415
  %v417 = vsel %vm92, %v411, %v413
  %v418 = vsel %vm92, %v415, %v411
  %419 = vrot.lane.b32.xlu0 %v360, 91
  %v420 = vpop.permute.xlu0 %419
  %421 = vrot.lane.b32.xlu0 %v363, 91
  %v422 = vpop.permute.xlu0 %421
  %423 = vrot.lane.b32.xlu0 %v361, 91
  %v424 = vpop.permute.xlu0 %423
  %v425 = vsel %vm102, %v422, %v424
  %v426 = vsel %vm102, %v420, %v422
  %v427 = vsel %vm102, %v424, %v420
  %428 = vrot.lane.b32.xlu0 %v360, 90
  %v429 = vpop.permute.xlu0 %428
  %430 = vrot.lane.b32.xlu0 %v363, 90
  %v431 = vpop.permute.xlu0 %430
  %432 = vrot.lane.b32.xlu0 %v361, 90
  %v433 = vpop.permute.xlu0 %432
  %v434 = vsel %vm112, %v431, %v433
  %v435 = vsel %vm112, %v429, %v431
  %v436 = vsel %vm112, %v433, %v429
  %v440 = vrot.slane %v372, 4
  %v441 = vrot.slane %v371, 4
  %v442 = vrot.slane %v373, 4
  %v449 = vrot.slane %v390, 4
  %v450 = vrot.slane %v389, 4
  %v451 = vrot.slane %v391, 4
  %v458 = vrot.slane %v408, 4
  %v459 = vrot.slane %v407, 4
  %v460 = vrot.slane %v409, 4
  %v467 = vrot.slane %v426, 4
  %v468 = vrot.slane %v425, 4
  %v469 = vrot.slane %v427, 4
  %v473 = vsel %vm152, %v360, %v440
  %v474 = vsel %vm152, %v363, %v441
  %v475 = vsel %vm152, %v361, %v442
  %v476 = vsel %vm152, %v381, %v449
  %v477 = vsel %vm152, %v380, %v450
  %v478 = vsel %vm152, %v382, %v451
  %v479 = vsel %vm152, %v399, %v458
  %v480 = vsel %vm152, %v398, %v459
  %v481 = vsel %vm152, %v400, %v460
  %v482 = vsel %vm152, %v417, %v467
  %v483 = vsel %vm152, %v416, %v468
  %v484 = vsel %vm152, %v418, %v469
  %v486 = vsel %vm152, %v435, 0
  %v489 = vsel %vm152, %v434, 0
  %v492 = vsel %vm152, %v436, 0
  %494 = vmatprep.subr.mxu0 %v474
  %495 = vmatpush1.msra.mxu0 %v473
  %496 = vmatprep.subr.mxu0 %v477
  %497 = vmatpush1.msra.mxu0 %v476
  %498 = vmatprep.subr.mxu0 %v480
  %499 = vmatpush1.msra.mxu0 %v479
  %500 = vmatprep.subr.mxu0 %v483
  %501 = vmatpush1.msra.mxu0 %v482
  %502 = vmatprep.subr.mxu0 %v489
  %503 = vmatpush1.msra.mxu0 %v486
  %504 = vmatprep.subr.mxu0 0.0
  %505 = vmatpush1.msra.mxu0 0.0
  %506 = vmatprep.subr.mxu0 0.0
  %507 = vmatpush1.msra.mxu0 0.0
  %508 = vmatprep.subr.mxu0 0.0
  %509 = vmatpush1.msra.mxu0 0.0
  %510 = vmatprep.subr.mxu0 0.0
  %511 = vmatpush1.msra.mxu0 0.0
  %512 = vmatprep.subr.mxu0 0.0
  %513 = vmatpush1.msra.mxu0 0.0
  %514 = vmatprep.subr.mxu0 0.0
  %515 = vmatpush1.msra.mxu0 0.0
  %516 = vmatprep.subr.mxu0 0.0
  %517 = vmatpush1.msra.mxu0 0.0
  %518 = vmatprep.subr.mxu0 0.0
  %519 = vmatpush1.msra.mxu0 0.0
  %520 = vmatprep.subr.mxu0 0.0
  %521 = vmatpush1.msra.mxu0 0.0
  %522 = vmatprep.subr.mxu0 0.0
  %523 = vmatpush1.msra.mxu0 0.0
  %524 = vmatprep.subr.mxu0 0.0
  %525 = vmatpush1.msra.mxu0 0.0
  %526 = vmatprep.subr.mxu0 0.0
  %527 = vmatpush1.msra.mxu0 0.0
  %528 = vmatprep.subr.mxu0 0.0
  %529 = vmatpush1.msra.mxu0 0.0
  %530 = vmatprep.subr.mxu0 0.0
  %531 = vmatpush1.msra.mxu0 0.0
  %532 = vmatprep.subr.mxu0 0.0
  %533 = vmatpush1.msra.mxu0 0.0
  %534 = vmatprep.subr.mxu0 0.0
  %535 = vmatpush1.msra.mxu0 0.0
  %536 = vmatprep.subr.mxu0 0.0
  %537 = vmatpush1.msra.mxu0 0.0
  %538 = vmatprep.subr.mxu0 0.0
  %539 = vmatpush1.msra.mxu0 0.0
  %540 = vmatprep.subr.mxu0 0.0
  %541 = vmatpush1.msra.mxu0 0.0
  %542 = vmatprep.subr.mxu0 0.0
  %543 = vmatpush1.msra.mxu0 0.0
  %544 = vmatprep.subr.mxu0 0.0
  %545 = vmatpush1.msra.mxu0 0.0
  %546 = vmatprep.subr.mxu0 0.0
  %547 = vmatpush1.msra.mxu0 0.0
  %548 = vmatprep.subr.mxu0 0.0
  %549 = vmatpush1.msra.mxu0 0.0
  %550 = vmatprep.subr.mxu0 0.0
  %551 = vmatpush1.msra.mxu0 0.0
  %552 = vmatprep.subr.mxu0 0.0
  %553 = vmatpush1.msra.mxu0 0.0
  %554 = vmatprep.subr.mxu0 0.0
  %555 = vmatpush1.msra.mxu0 0.0
  %556 = vmatprep.subr.mxu0 0.0
  %557 = vmatpush1.msra.mxu0 0.0
  %558 = vmatprep.mubr.f32.mxu0 0.0
  %559 = vmatmul.mubr.f32.gmra.mrb[0].mxu0 %v167
  %v560 = vpop.f32.mrb[0].mxu0
  %v561 = vadd.f32 0.0, %v560
  %v562 = vpop.f32.mrb[0].mxu0
  %v563 = vadd.f32 0.0, %v562
  %564 = vdwg.mxu0
  %565 = vmatprep.subr.mxu0 0.0
  %566 = vmatpush1.msra.mxu0 %v475
  %567 = vmatprep.subr.mxu0 0.0
  %568 = vmatpush1.msra.mxu0 %v478
  %569 = vmatprep.subr.mxu0 0.0
  %570 = vmatpush1.msra.mxu0 %v481
  %571 = vmatprep.subr.mxu0 0.0
  %572 = vmatpush1.msra.mxu0 %v484
  %573 = vmatprep.subr.mxu0 0.0
  %574 = vmatpush1.msra.mxu0 %v492
  %575 = vmatprep.subr.mxu0 0.0
  %576 = vmatpush1.msra.mxu0 0.0
  %577 = vmatprep.subr.mxu0 0.0
  %578 = vmatpush1.msra.mxu0 0.0
  %579 = vmatprep.subr.mxu0 0.0
  %580 = vmatpush1.msra.mxu0 0.0
  %581 = vmatprep.subr.mxu0 0.0
  %582 = vmatpush1.msra.mxu0 0.0
  %583 = vmatprep.subr.mxu0 0.0
  %584 = vmatpush1.msra.mxu0 0.0
  %585 = vmatprep.subr.mxu0 0.0
  %586 = vmatpush1.msra.mxu0 0.0
  %587 = vmatprep.subr.mxu0 0.0
  %588 = vmatpush1.msra.mxu0 0.0
  %589 = vmatprep.subr.mxu0 0.0
  %590 = vmatpush1.msra.mxu0 0.0
  %591 = vmatprep.subr.mxu0 0.0
  %592 = vmatpush1.msra.mxu0 0.0
  %593 = vmatprep.subr.mxu0 0.0
  %594 = vmatpush1.msra.mxu0 0.0
  %595 = vmatprep.subr.mxu0 0.0
  %596 = vmatpush1.msra.mxu0 0.0
  %597 = vmatprep.subr.mxu0 0.0
  %598 = vmatpush1.msra.mxu0 0.0
  %599 = vmatprep.subr.mxu0 0.0
  %600 = vmatpush1.msra.mxu0 0.0
  %601 = vmatprep.subr.mxu0 0.0
  %602 = vmatpush1.msra.mxu0 0.0
  %603 = vmatprep.subr.mxu0 0.0
  %604 = vmatpush1.msra.mxu0 0.0
  %605 = vmatprep.subr.mxu0 0.0
  %606 = vmatpush1.msra.mxu0 0.0
  %607 = vmatprep.subr.mxu0 0.0
  %608 = vmatpush1.msra.mxu0 0.0
  %609 = vmatprep.subr.mxu0 0.0
  %610 = vmatpush1.msra.mxu0 0.0
  %611 = vmatprep.subr.mxu0 0.0
  %612 = vmatpush1.msra.mxu0 0.0
  %613 = vmatprep.subr.mxu0 0.0
  %614 = vmatpush1.msra.mxu0 0.0
  %615 = vmatprep.subr.mxu0 0.0
  %616 = vmatpush1.msra.mxu0 0.0
  %617 = vmatprep.subr.mxu0 0.0
  %618 = vmatpush1.msra.mxu0 0.0
  %619 = vmatprep.subr.mxu0 0.0
  %620 = vmatpush1.msra.mxu0 0.0
  %621 = vmatprep.subr.mxu0 0.0
  %622 = vmatpush1.msra.mxu0 0.0
  %623 = vmatprep.subr.mxu0 0.0
  %624 = vmatpush1.msra.mxu0 0.0
  %625 = vmatprep.subr.mxu0 0.0
  %626 = vmatpush1.msra.mxu0 0.0
  %627 = vmatprep.subr.mxu0 0.0
  %628 = vmatpush1.msra.mxu0 0.0
  %629 = vmatprep.mubr.f32.mxu0 0.0
  %630 = vmatmul.mubr.f32.gmra.mrb[0].mxu0 %v167
  %v631 = vpop.f32.mrb[0].mxu0
  %v632 = vadd.f32 0.0, %v631
  %v633 = vpop.f32.mrb[0].mxu0
  %634 = vdwg.mxu0
  %v635 = vmul.f32 %v561, %v323
  %v636 = vmul.f32 %v563, %v327
  %v637 = vmul.f32 %v632, %v331
  %v638 = vadd.f32 %v635, %v636
  %v639 = vadd.f32 %v638, %v637
  %640 = vadd.xlane.f32.xlu0 %v639
  %v641 = vpop.xlane.xlu0 %640
  %v642 = vadd.f32 %v342, %v641
  %v643 = vmul.f32 %v635, %v635
  %v644 = vmul.f32 %v636, %v636
  %v645 = vmul.f32 %v637, %v637
  %v646 = vadd.f32 %v643, %v644
  %v647 = vadd.f32 %v646, %v645
  %648 = vadd.xlane.f32.xlu0 %v647
  %v649 = vpop.xlane.xlu0 %648
  %v650 = vadd.f32 %v350, %v649
  %s651 = smul.u32 0, 2
  %s652 = sadd.s32 %s651, 1
  %s653 = smul.u32 %s652, 384
  %s654 = sshra.s32 %s653, 7
  %s655 = sand.u32 %s653, 127
  %s656 = smul.addr %s654, 8
  %s657 = scalar_lea.vmem %s5, %s656
  %658 = vst [vmem:[%s657] sm:$0xff] %v561
  %659 = vst [vmem:[%s657 + $0x8] sm:$0xff] %v563
  %660 = vst [vmem:[%s657 + $0x10] sm:$0xff] %v632
  %v661 = vld [vmem:[#allocation2] sm:$0xff]
  %v662 = vadd.f32 %v661, %v642
  %vm663 = vcmask 7168
  %664 = vst.msk [vmem:[#allocation2] sm:$0xff] %vm663, %v662
  %v665 = vld [vmem:[#allocation3] sm:$0xff]
  %v666 = vadd.f32 %v665, %v650
  %667 = vst.msk [vmem:[#allocation3] sm:$0xff] %vm663, %v666
  // Predicated region
  $region26: #{conv_bn_relu.1} parent=0 // pred_check
    %p668 = pneg %p20
  $region27: #{conv_bn_relu.1} parent=0 // pred_check_branch
    %670 = sbr.rel (%p668) target = $region29
  $region28: #{conv_bn_relu.1} parent=0 // pred_region
    %v671 = vld [vmem:[#allocation2] sm:$0xff]
    %v672 = vmul.f32 %v671, 0.001953125
    %v673 = vld [vmem:[#allocation3] sm:$0xff]
    %v674 = vmul.f32 %v673, 0.001953125
    %v675 = vmul.f32 %v672, %v672
    %v676 = vsub.f32 %v674, %v675
    %v677 = vmax.f32 %v676, 0.0
    %v678 = vld [vmem:[%s2] sm:$0xff]
    %v679 = vadd.f32 %v677, 1e-05
    %v680 = vrsqrt.pop %v679
    %v681 = vmul.f32 %v678, %v680
    %v682 = vld [vmem:[%s3] sm:$0xff]
    %v683 = vmul.f32 %v672, %v681
    %v684 = vsub.f32 %v682, %v683
    loop: start=0, step=1, limit=2
    $region30: #{conv_bn_relu.1} parent=28 // loop_pre_header
      _
    $region31: #{conv_bn_relu.1} parent=28 // loop_header
      %s686 = sphi 0, %s690
      %p687 = scmp.ge.s32.totalorder %s686, 2
    $region32: #{conv_bn_relu.1} parent=28 // loop_header_branch
      %689 = sbr.rel (%p687) target = $region36
    $region33: #{conv_bn_relu.1} parent=28 // loop_body
      %s691 = smul.u32 %s686, 384
      %s692 = sshra.s32 %s691, 7
      %s693 = sand.u32 %s691, 127
      %s694 = smul.addr %s692, 8
      %s695 = scalar_lea.vmem %s5, %s694
      %v696 = vld [vmem:[%s695] sm:$0xff]
      %v697 = vld [vmem:[%s695 + $0x8] sm:$0xff]
      %v698 = vld [vmem:[%s695 + $0x10] sm:$0xff]
      %700 = vset.pattern.permute.xlu0 0
      %701 = vperm.xlu0 %700, %v681
      %v702 = vpop.permute.xlu0 %701
      %v704 = vmul.f32 %v696, %v702
      %v705 = vmul.f32 %v697, %v702
      %v706 = vmul.f32 %v698, %v702
      %708 = vset.pattern.permute.xlu0 0
      %709 = vperm.xlu0 %708, %v684
      %v710 = vpop.permute.xlu0 %709
      %v712 = vadd.f32 %v704, %v710
      %v713 = vadd.f32 %v705, %v710
      %v714 = vadd.f32 %v706, %v710
      %v715 = vmax.f32 %v712, 0.0
      %v716 = vmax.f32 %v713, 0.0
      %v717 = vmax.f32 %v714, 0.0
      %718 = vst [vmem:[%s695] sm:$0xff] %v715
      %719 = vst [vmem:[%s695 + $0x8] sm:$0xff] %v716
      %720 = vst [vmem:[%s695 + $0x10] sm:$0xff] %v717
    $region34: #{conv_bn_relu.1} parent=28 // loop_footer
      %s690 = sadd.s32 1, %s686
    $region35: #{conv_bn_relu.1} parent=28 // loop_footer_branch
      %685 = sbr.rel target = $region31
    $region36: #{conv_bn_relu.1} parent=28 // loop_exit
      _
  $region29: #{conv_bn_relu.1} parent=0 // pred_fallthru
    _
  // Predicated region
  $region37: #{conv_bn_relu.1} parent=0 // pred_check
    _
  $region38: #{conv_bn_relu.1} parent=0 // pred_check_branch
    %722 = sbr.rel (0) target = $region40
  $region39: #{conv_bn_relu.1} parent=0 // pred_region
    _
  $region40: #{conv_bn_relu.1} parent=0 // pred_fallthru
    _
  // Predicated region
  $region41: #{conv_bn_relu.1} parent=0 // pred_check
    _
  $region42: #{conv_bn_relu.1} parent=0 // pred_check_branch
    %724 = sbr.rel (0) target = $region44
  $region43: #{conv_bn_relu.1} parent=0 // pred_region
    _
  $region44: #{conv_bn_relu.1} parent=0 // pred_fallthru
    _

</llo_original>
